<compile_context>
chip_gen: v7x
topology: tpu7x:2x2x1
jax: 0.10.0
libtpu: 0.0.40
codegen_flags: <defaults>
</compile_context>

<pallas_src>
import functools
import math

import jax
import jax.numpy as jnp
from jax.experimental import pallas as pl
from jax.experimental.pallas import tpu as pltpu


def _graph_transition_kernel(x_ref, a_ref, w_ref, o_ref, *, depth, n, hp,
                             off_bm_mid, off_bu_mid, off_bu0, off_bu_last, off_big):
    """One batch element per grid step: x_ref (1,n,2), a_ref (1,1,1), w_ref (rows,128)."""
    f32 = jnp.float32
    cd = w_ref.dtype                        # matmul operand dtype (f32, or bf16 on v6e/v7x)
    xb = x_ref[0].astype(cd)                # (n, 2)   node features [obs, coord]
    a = a_ref[0].astype(f32)                # (1, 1)   action for this batch element

    # ---- messenger layer 0 via linearity split: the (n*n, 5) msg_in slab is never built ----
    hx = jnp.dot(xb, w_ref[0:2, :], preferred_element_type=f32)      # x_i part  (n, hp)
    hy = jnp.dot(xb, w_ref[2:4, :], preferred_element_type=f32)      # x_j part  (n, hp)
    hc = a * w_ref[4:5, :].astype(f32) + w_ref[5:6, :].astype(f32)   # action+b  (1, hp)
    h = jnp.maximum(hx[:, None, :] + hy[None, :, :] + hc[None, :, :], 0.0)   # (n, n, hp)
    h = h.reshape(n * n, hp)                                         # pair rows m = i*n + j

    # ---- messenger mid layers (depth-2), 128-lane MXU matmuls, f32 accumulate ----
    row = off_big
    for l in range(depth - 2):
        w = w_ref[row:row + hp, :]
        b = w_ref[off_bm_mid + l:off_bm_mid + l + 1, :].astype(f32)
        h = jnp.maximum(jnp.dot(h.astype(cd), w, preferred_element_type=f32) + b, 0.0)
        row += hp

    # ---- message sum over source node j: in-register grouped reduce (no dense sum matrix) ----
    hsum = jnp.sum(h.reshape(n, n, hp), axis=1)                      # (n, hp)

    # ---- updater layer 0 (messenger last layer + [x, msg] concat folded into w_msgu) ----
    w_msgu = w_ref[row:row + hp, :]
    row += hp
    g = (jnp.dot(xb, w_ref[6:8, :], preferred_element_type=f32)
         + jnp.dot(hsum.astype(cd), w_msgu, preferred_element_type=f32)
         + w_ref[off_bu0:off_bu0 + 1, :].astype(f32))
    g = jnp.maximum(g, 0.0)                                          # depth >= 2 -> not last

    # ---- updater mid layers (depth-2) ----
    for l in range(depth - 2):
        w = w_ref[row:row + hp, :]
        b = w_ref[off_bu_mid + l:off_bu_mid + l + 1, :].astype(f32)
        g = jnp.maximum(jnp.dot(g.astype(cd), w, preferred_element_type=f32) + b, 0.0)
        row += hp

    # ---- updater last layer; output padded to 128 lanes (real value in lane 0) ----
    w_out = w_ref[row:row + hp, :]
    out = (jnp.dot(g.astype(cd), w_out, preferred_element_type=f32)
           + w_ref[off_bu_last:off_bu_last + 1, :].astype(f32))
    o_ref[0] = out.astype(o_ref.dtype)                               # unmasked lane-dense store


def graph_transition_forward(obs, action, messenger_params, updater_params,
                             *, param_dtype=jnp.float32):
    """GraphTransitionModel.forward(obs, action) -> [B, n]."""
    B, n = obs.shape
    depth = len(messenger_params)
    assert depth >= 2 and len(updater_params) == depth
    assert messenger_params[0][0].shape[0] == 5
    assert messenger_params[-1][0].shape[1] == 1          # latent_size == 1 required by forward()
    assert updater_params[0][0].shape[0] == 3
    HP = 128                                               # lane-padded hidden width

    # --- append_index(obs) -> [B, n, 2]; action as (B,1,1) ---
    coor = jnp.arange(n, dtype=jnp.float32) / n
    x = jnp.stack([obs.astype(jnp.float32), jnp.broadcast_to(coor, (B, n))], axis=-1)
    act = action.astype(jnp.float32).reshape(B, 1, 1)

    # --- pack every parameter into one lane-padded slab (single DMA, VMEM-resident) ---
    def pad_cols(a):
        return jnp.pad(a, ((0, 0), (0, HP - a.shape[1])))

    def pad_mat(a):
        return jnp.pad(a, ((0, HP - a.shape[0]), (0, HP - a.shape[1])))

    wm0, bm0 = messenger_params[0]                         # (5, H), (1, H)
    wm_last, bm_last = messenger_params[-1]                # (H, 1), (1, 1)
    wu0, bu0 = updater_params[0]                           # (3, H), (1, H)
    wu_last, bu_last = updater_params[-1]                  # (H, 1), (1, 1)

    # Fold: msg = hsum @ wm_last + n*bm_last; updater L0 uses msg * wu0[2]
    #   ==>  hsum @ (wm_last @ wu0[2:3])  with bias  bu0 + n * bm_last * wu0[2:3].
    w_msgu = wm_last @ wu0[2:3, :]                         # (H, H)
    bu0_fused = bu0 + float(n) * bm_last * wu0[2:3, :]     # (1, H)

    small = [wm0[0:2, :],      # rows 0:2  messenger L0, x_i rows
             wm0[2:4, :],      # rows 2:4  messenger L0, x_j rows
             wm0[4:5, :],      # row  4    messenger L0, action row
             bm0,              # row  5    messenger L0 bias
             wu0[0:2, :]]      # rows 6:8  updater  L0, x rows
    off_bm_mid = 8
    small += [messenger_params[l][1] for l in range(1, depth - 1)]   # messenger mid biases
    off_bu_mid = off_bm_mid + (depth - 2)
    small += [updater_params[l][1] for l in range(1, depth - 1)]     # updater mid biases
    off_bu0 = off_bu_mid + (depth - 2)
    small += [bu0_fused]
    off_bu_last = off_bu0 + 1
    small += [bu_last]
    n_small = off_bu_last + 1
    off_big = ((n_small + 7) // 8) * 8                     # 8-sublane aligned start of matrices
    small_blk = jnp.concatenate([pad_cols(s) for s in small], axis=0)
    small_blk = jnp.pad(small_blk, ((0, off_big - n_small), (0, 0)))

    bigs = [pad_mat(messenger_params[l][0]) for l in range(1, depth - 1)]
    bigs += [pad_mat(w_msgu)]
    bigs += [pad_mat(updater_params[l][0]) for l in range(1, depth - 1)]
    bigs += [pad_mat(wu_last)]
    slab = jnp.concatenate([small_blk] + bigs, axis=0).astype(param_dtype)

    kernel = functools.partial(
        _graph_transition_kernel, depth=depth, n=n, hp=HP,
        off_bm_mid=off_bm_mid, off_bu_mid=off_bu_mid,
        off_bu0=off_bu0, off_bu_last=off_bu_last, off_big=off_big)

    out = pl.pallas_call(
        kernel,
        grid=(B,),
        in_specs=[pl.BlockSpec((1, n, 2), lambda b: (b, 0, 0)),
                  pl.BlockSpec((1, 1, 1), lambda b: (b, 0, 0)),
                  pl.BlockSpec(slab.shape, lambda b: (0, 0))],     # constant -> weights resident
        out_specs=pl.BlockSpec((1, n, HP), lambda b: (b, 0, 0)),
        out_shape=jax.ShapeDtypeStruct((B, n, HP), jnp.float32),
        compiler_params=pltpu.CompilerParams(
            dimension_semantics=("parallel",)),                    # v7x: split batch over 2 TCs
    )(x, act, slab)
    return out[:, :, 0]                                            # [B, n] (lane 0 holds result)


def init_mlp_params(key, in_dim, depth, mid_weight, out_dim):
    """Xavier-uniform weights stored pre-transposed (in, out); biases stored as (1, out)."""
    dims = [in_dim] + [mid_weight] * (depth - 1) + [out_dim]
    params = []
    for i in range(len(dims) - 1):
        key, wk, bk = jax.random.split(key, 3)
        fan_in, fan_out = dims[i], dims[i + 1]
        bound = math.sqrt(6.0 / (fan_in + fan_out))
        w = jax.random.uniform(wk, (fan_in, fan_out), jnp.float32, -bound, bound)
        # torch init zeroes biases; small random biases here so the bias path is exercised too.
        b = jax.random.uniform(bk, (1, fan_out), jnp.float32, -0.1, 0.1)
        params.append((w, b))
    return params


# ---------------- pure-JAX reference (mirrors the PyTorch forward exactly) ----------------
def _mlp_ref(params, h):
    n_layers = len(params)
    for i, (w, b) in enumerate(params):
        h = h @ w + b
        if i != n_layers - 1:
            h = jnp.maximum(h, 0.0)
    return h


def reference_forward(obs, action, messenger_params, updater_params):
    B, n = obs.shape
    coor = jnp.arange(n, dtype=jnp.float32) / n
    x = jnp.stack([obs, jnp.broadcast_to(coor, (B, n))], axis=-1)            # append_index
    xi = jnp.broadcast_to(x[:, :, None, :], (B, n, n, 2))
    xj = jnp.broadcast_to(x[:, None, :, :], (B, n, n, 2))
    a = jnp.broadcast_to(action[:, None, None, None], (B, n, n, 1))
    msg_in = jnp.concatenate([xi, xj, a], axis=-1)                           # [B, n, n, 5]
    messages = _mlp_ref(messenger_params, msg_in)                            # [B, n, n, 1]
    msg = jnp.squeeze(jnp.sum(messages, axis=-2), axis=-1)                   # [B, n]
    h = jnp.concatenate([x, msg[..., None]], axis=-1)                        # [B, n, 3]
    upd = _mlp_ref(updater_params, h)                                        # [B, n, 1]
    return jnp.squeeze(upd, axis=-1)                                         # [B, n]


if __name__ == "__main__":
    # GraphTransitionModel(in_channels, depth=4, mid_weight=32, latent_size=1):
    #   messenger = MLPModel(5, depth, mid_weight, 1), updater = MLPModel(3, depth, mid_weight, 1)
    # obs: [B, n_nodes], action: [B]  (latent_size=1 is required by forward()/update()).
    depth, mid_weight, latent_size = 4, 32, 1
    B, n_nodes = 2, 8

    key = jax.random.PRNGKey(0)
    key, ko, ka, km, ku = jax.random.split(key, 5)
    obs = jax.random.normal(ko, (B, n_nodes), jnp.float32)
    action = jax.random.randint(ka, (B,), 0, 4).astype(jnp.float32)

    messenger_params = init_mlp_params(km, 5, depth, mid_weight, latent_size)
    updater_params = init_mlp_params(ku, 3, depth, mid_weight, latent_size)

    ref = reference_forward(obs, action, messenger_params, updater_params)

    # f32 matmul operands (v5e dtype policy; correctness baseline).
    fwd_f32 = jax.jit(functools.partial(graph_transition_forward, param_dtype=jnp.float32))
    out_f32 = jax.block_until_ready(fwd_f32(obs, action, messenger_params, updater_params))
    assert out_f32.shape == (B, n_nodes), out_f32.shape
    assert jnp.allclose(out_f32, ref, atol=5e-4, rtol=5e-4), (out_f32, ref)

    # bf16 matmul operands, f32 accumulate / bias / ReLU (v6e & v7x dtype policy).
    fwd_bf16 = jax.jit(functools.partial(graph_transition_forward, param_dtype=jnp.bfloat16))
    out_bf16 = jax.block_until_ready(fwd_bf16(obs, action, messenger_params, updater_params))
    assert out_bf16.shape == (B, n_nodes), out_bf16.shape
    assert jnp.allclose(out_bf16, ref, atol=5e-2, rtol=5e-2), (out_bf16, ref)

    print("KERNEL_OK")
</pallas_src>

<mosaic_0001>
module attributes {stable_mosaic.version = 11 : i64} {
  func.func @_graph_transition_kernel(%arg0: i32, %arg1: memref<1x8x2xf32, #tpu.memory_space<vmem>>, %arg2: memref<1x1x1xf32, #tpu.memory_space<vmem>>, %arg3: memref<784x128xf32, #tpu.memory_space<vmem>>, %arg4: memref<1x8x128xf32, #tpu.memory_space<vmem>>) attributes {dimension_semantics = [#tpu.dimension_semantics<parallel>], iteration_bounds = array<i64: 2>, scalar_prefetch = 0 : i64, scratch_operands = 0 : i64, tpu.core_type = #tpu.core_type<tc>, window_params = [{transform_indices = @transform_0, window_bounds = array<i64: 1, 8, 2>}, {transform_indices = @transform_1, window_bounds = array<i64: 1, 1, 1>}, {pipeline_mode = #tpu.pipeline_mode<synchronous>, transform_indices = @transform_2, window_bounds = array<i64: 784, 128>}, {transform_indices = @transform_3, window_bounds = array<i64: 1, 8, 128>}]} {
    %c0 = arith.constant 0 : index
    %c0_0 = arith.constant 0 : index
    %c0_1 = arith.constant 0 : index
    %0 = vector.load %arg1[%c0, %c0_0, %c0_1] : memref<1x8x2xf32, #tpu.memory_space<vmem>>, vector<1x8x2xf32>
    %1 = vector.shape_cast %0 : vector<1x8x2xf32> to vector<8x2xf32>
    %c0_2 = arith.constant 0 : index
    %c0_3 = arith.constant 0 : index
    %c0_4 = arith.constant 0 : index
    %2 = vector.load %arg2[%c0_2, %c0_3, %c0_4] : memref<1x1x1xf32, #tpu.memory_space<vmem>>, vector<1x1x1xf32>
    %3 = vector.shape_cast %2 : vector<1x1x1xf32> to vector<1x1xf32>
    %c0_5 = arith.constant 0 : index
    %c0_6 = arith.constant 0 : index
    %4 = vector.load %arg3[%c0_5, %c0_6] : memref<784x128xf32, #tpu.memory_space<vmem>>, vector<2x128xf32>
    %cst = arith.constant dense<0.000000e+00> : vector<8x128xf32>
    %5 = tpu.matmul %1, %4, %cst {dimension_numbers = #tpu.dot_dimension_numbers<[1], [0], [0], [1], [0, 0, 1, 1], [], []>} : vector<8x2xf32>, vector<2x128xf32>, vector<8x128xf32> -> vector<8x128xf32>
    %c2 = arith.constant 2 : index
    %c0_7 = arith.constant 0 : index
    %6 = vector.load %arg3[%c2, %c0_7] : memref<784x128xf32, #tpu.memory_space<vmem>>, vector<2x128xf32>
    %cst_8 = arith.constant dense<0.000000e+00> : vector<8x128xf32>
    %7 = tpu.matmul %1, %6, %cst_8 {dimension_numbers = #tpu.dot_dimension_numbers<[1], [0], [0], [1], [0, 0, 1, 1], [], []>} : vector<8x2xf32>, vector<2x128xf32>, vector<8x128xf32> -> vector<8x128xf32>
    %c4 = arith.constant 4 : index
    %c0_9 = arith.constant 0 : index
    %8 = vector.load %arg3[%c4, %c0_9] : memref<784x128xf32, #tpu.memory_space<vmem>>, vector<1x128xf32>
    %9 = vector.broadcast %3 : vector<1x1xf32> to vector<1x128xf32>
    %10 = arith.mulf %9, %8 : vector<1x128xf32>
    %c5 = arith.constant 5 : index
    %c0_10 = arith.constant 0 : index
    %11 = vector.load %arg3[%c5, %c0_10] : memref<784x128xf32, #tpu.memory_space<vmem>>, vector<1x128xf32>
    %12 = arith.addf %10, %11 : vector<1x128xf32>
    %13 = vector.shape_cast %5 : vector<8x128xf32> to vector<8x1x128xf32>
    %14 = vector.shape_cast %7 : vector<8x128xf32> to vector<1x8x128xf32>
    %15 = vector.broadcast %13 : vector<8x1x128xf32> to vector<8x8x128xf32>
    %16 = vector.broadcast %14 : vector<1x8x128xf32> to vector<8x8x128xf32>
    %17 = arith.addf %15, %16 : vector<8x8x128xf32>
    %18 = vector.shape_cast %12 : vector<1x128xf32> to vector<1x1x128xf32>
    %19 = vector.broadcast %18 : vector<1x1x128xf32> to vector<8x8x128xf32>
    %20 = arith.addf %17, %19 : vector<8x8x128xf32>
    %cst_11 = arith.constant 0.000000e+00 : f32
    %21 = vector.broadcast %cst_11 : f32 to vector<8x8x128xf32>
    %22 = arith.maximumf %20, %21 : vector<8x8x128xf32>
    %23 = vector.shape_cast %22 : vector<8x8x128xf32> to vector<64x128xf32>
    %c16 = arith.constant 16 : index
    %c0_12 = arith.constant 0 : index
    %24 = vector.load %arg3[%c16, %c0_12] : memref<784x128xf32, #tpu.memory_space<vmem>>, vector<128x128xf32>
    %c8 = arith.constant 8 : index
    %c0_13 = arith.constant 0 : index
    %25 = vector.load %arg3[%c8, %c0_13] : memref<784x128xf32, #tpu.memory_space<vmem>>, vector<1x128xf32>
    %cst_14 = arith.constant dense<0.000000e+00> : vector<64x128xf32>
    %26 = tpu.matmul %23, %24, %cst_14 {dimension_numbers = #tpu.dot_dimension_numbers<[1], [0], [0], [1], [0, 0, 1, 1], [], []>} : vector<64x128xf32>, vector<128x128xf32>, vector<64x128xf32> -> vector<64x128xf32>
    %27 = vector.broadcast %25 : vector<1x128xf32> to vector<64x128xf32>
    %28 = arith.addf %26, %27 : vector<64x128xf32>
    %cst_15 = arith.constant 0.000000e+00 : f32
    %29 = vector.broadcast %cst_15 : f32 to vector<64x128xf32>
    %30 = arith.maximumf %28, %29 : vector<64x128xf32>
    %c144 = arith.constant 144 : index
    %c0_16 = arith.constant 0 : index
    %31 = vector.load %arg3[%c144, %c0_16] : memref<784x128xf32, #tpu.memory_space<vmem>>, vector<128x128xf32>
    %c9 = arith.constant 9 : index
    %c0_17 = arith.constant 0 : index
    %32 = vector.load %arg3[%c9, %c0_17] : memref<784x128xf32, #tpu.memory_space<vmem>>, vector<1x128xf32>
    %cst_18 = arith.constant dense<0.000000e+00> : vector<64x128xf32>
    %33 = tpu.matmul %30, %31, %cst_18 {dimension_numbers = #tpu.dot_dimension_numbers<[1], [0], [0], [1], [0, 0, 1, 1], [], []>} : vector<64x128xf32>, vector<128x128xf32>, vector<64x128xf32> -> vector<64x128xf32>
    %34 = vector.broadcast %32 : vector<1x128xf32> to vector<64x128xf32>
    %35 = arith.addf %33, %34 : vector<64x128xf32>
    %cst_19 = arith.constant 0.000000e+00 : f32
    %36 = vector.broadcast %cst_19 : f32 to vector<64x128xf32>
    %37 = arith.maximumf %35, %36 : vector<64x128xf32>
    %38 = vector.shape_cast %37 : vector<64x128xf32> to vector<8x8x128xf32>
    %cst_20 = arith.constant dense<0.000000e+00> : vector<8x128xf32>
    %39 = vector.multi_reduction <add>, %38, %cst_20 [1] : vector<8x8x128xf32> to vector<8x128xf32>
    %c272 = arith.constant 272 : index
    %c0_21 = arith.constant 0 : index
    %40 = vector.load %arg3[%c272, %c0_21] : memref<784x128xf32, #tpu.memory_space<vmem>>, vector<128x128xf32>
    %c6 = arith.constant 6 : index
    %c0_22 = arith.constant 0 : index
    %41 = vector.load %arg3[%c6, %c0_22] : memref<784x128xf32, #tpu.memory_space<vmem>>, vector<2x128xf32>
    %cst_23 = arith.constant dense<0.000000e+00> : vector<8x128xf32>
    %42 = tpu.matmul %1, %41, %cst_23 {dimension_numbers = #tpu.dot_dimension_numbers<[1], [0], [0], [1], [0, 0, 1, 1], [], []>} : vector<8x2xf32>, vector<2x128xf32>, vector<8x128xf32> -> vector<8x128xf32>
    %cst_24 = arith.constant dense<0.000000e+00> : vector<8x128xf32>
    %43 = tpu.matmul %39, %40, %cst_24 {dimension_numbers = #tpu.dot_dimension_numbers<[1], [0], [0], [1], [0, 0, 1, 1], [], []>} : vector<8x128xf32>, vector<128x128xf32>, vector<8x128xf32> -> vector<8x128xf32>
    %44 = arith.addf %42, %43 : vector<8x128xf32>
    %c12 = arith.constant 12 : index
    %c0_25 = arith.constant 0 : index
    %45 = vector.load %arg3[%c12, %c0_25] : memref<784x128xf32, #tpu.memory_space<vmem>>, vector<1x128xf32>
    %46 = vector.broadcast %45 : vector<1x128xf32> to vector<8x128xf32>
    %47 = arith.addf %44, %46 : vector<8x128xf32>
    %cst_26 = arith.constant 0.000000e+00 : f32
    %48 = vector.broadcast %cst_26 : f32 to vector<8x128xf32>
    %49 = arith.maximumf %47, %48 : vector<8x128xf32>
    %c400 = arith.constant 400 : index
    %c0_27 = arith.constant 0 : index
    %50 = vector.load %arg3[%c400, %c0_27] : memref<784x128xf32, #tpu.memory_space<vmem>>, vector<128x128xf32>
    %c10 = arith.constant 10 : index
    %c0_28 = arith.constant 0 : index
    %51 = vector.load %arg3[%c10, %c0_28] : memref<784x128xf32, #tpu.memory_space<vmem>>, vector<1x128xf32>
    %cst_29 = arith.constant dense<0.000000e+00> : vector<8x128xf32>
    %52 = tpu.matmul %49, %50, %cst_29 {dimension_numbers = #tpu.dot_dimension_numbers<[1], [0], [0], [1], [0, 0, 1, 1], [], []>} : vector<8x128xf32>, vector<128x128xf32>, vector<8x128xf32> -> vector<8x128xf32>
    %53 = vector.broadcast %51 : vector<1x128xf32> to vector<8x128xf32>
    %54 = arith.addf %52, %53 : vector<8x128xf32>
    %cst_30 = arith.constant 0.000000e+00 : f32
    %55 = vector.broadcast %cst_30 : f32 to vector<8x128xf32>
    %56 = arith.maximumf %54, %55 : vector<8x128xf32>
    %c528 = arith.constant 528 : index
    %c0_31 = arith.constant 0 : index
    %57 = vector.load %arg3[%c528, %c0_31] : memref<784x128xf32, #tpu.memory_space<vmem>>, vector<128x128xf32>
    %c11 = arith.constant 11 : index
    %c0_32 = arith.constant 0 : index
    %58 = vector.load %arg3[%c11, %c0_32] : memref<784x128xf32, #tpu.memory_space<vmem>>, vector<1x128xf32>
    %cst_33 = arith.constant dense<0.000000e+00> : vector<8x128xf32>
    %59 = tpu.matmul %56, %57, %cst_33 {dimension_numbers = #tpu.dot_dimension_numbers<[1], [0], [0], [1], [0, 0, 1, 1], [], []>} : vector<8x128xf32>, vector<128x128xf32>, vector<8x128xf32> -> vector<8x128xf32>
    %60 = vector.broadcast %58 : vector<1x128xf32> to vector<8x128xf32>
    %61 = arith.addf %59, %60 : vector<8x128xf32>
    %cst_34 = arith.constant 0.000000e+00 : f32
    %62 = vector.broadcast %cst_34 : f32 to vector<8x128xf32>
    %63 = arith.maximumf %61, %62 : vector<8x128xf32>
    %c656 = arith.constant 656 : index
    %c0_35 = arith.constant 0 : index
    %64 = vector.load %arg3[%c656, %c0_35] : memref<784x128xf32, #tpu.memory_space<vmem>>, vector<128x128xf32>
    %cst_36 = arith.constant dense<0.000000e+00> : vector<8x128xf32>
    %65 = tpu.matmul %63, %64, %cst_36 {dimension_numbers = #tpu.dot_dimension_numbers<[1], [0], [0], [1], [0, 0, 1, 1], [], []>} : vector<8x128xf32>, vector<128x128xf32>, vector<8x128xf32> -> vector<8x128xf32>
    %c13 = arith.constant 13 : index
    %c0_37 = arith.constant 0 : index
    %66 = vector.load %arg3[%c13, %c0_37] : memref<784x128xf32, #tpu.memory_space<vmem>>, vector<1x128xf32>
    %67 = vector.broadcast %66 : vector<1x128xf32> to vector<8x128xf32>
    %68 = arith.addf %65, %67 : vector<8x128xf32>
    %c0_38 = arith.constant 0 : index
    %c0_39 = arith.constant 0 : index
    %c0_40 = arith.constant 0 : index
    %69 = vector.load %arg4[%c0_38, %c0_39, %c0_40] : memref<1x8x128xf32, #tpu.memory_space<vmem>>, vector<1x8x128xf32>
    %70 = vector.shape_cast %69 : vector<1x8x128xf32> to vector<8x128xf32>
    %71 = vector.shape_cast %68 : vector<8x128xf32> to vector<1x8x128xf32>
    tpu.vector_store %arg4[%c0_38, %c0_39, %c0_40], %71 {strides = array<i32>} : memref<1x8x128xf32, #tpu.memory_space<vmem>>, vector<1x8x128xf32>,
    return
  }
  func.func @transform_0(%arg0: i32) -> (i32, i32, i32) {
    %c0_i32 = arith.constant 0 : i32
    %c0_i32_0 = arith.constant 0 : i32
    %c0_i32_1 = arith.constant 0 : i32
    return %arg0, %c0_i32, %c0_i32_0 : i32, i32, i32
  }
  func.func @transform_1(%arg0: i32) -> (i32, i32, i32) {
    %c0_i32 = arith.constant 0 : i32
    %c0_i32_0 = arith.constant 0 : i32
    %c0_i32_1 = arith.constant 0 : i32
    return %arg0, %c0_i32, %c0_i32_0 : i32, i32, i32
  }
  func.func @transform_2(%arg0: i32) -> (i32, i32) {
    %c0_i32 = arith.constant 0 : i32
    %c0_i32_0 = arith.constant 0 : i32
    %c0_i32_1 = arith.constant 0 : i32
    return %c0_i32, %c0_i32_0 : i32, i32
  }
  func.func @transform_3(%arg0: i32) -> (i32, i32, i32) {
    %c0_i32 = arith.constant 0 : i32
    %c0_i32_0 = arith.constant 0 : i32
    %c0_i32_1 = arith.constant 0 : i32
    return %arg0, %c0_i32, %c0_i32_0 : i32, i32, i32
  }
}

</mosaic_0001>

<llo_original>
// kernel: graph_transition_forward.1
$region0: #{graph_transition_forward.1}
  #allocation0 [shape = 'u32[]', space=smem, size = 0x4, offset = 0x4, fixed_abs, tag = 'smem constant byte address 0x4 - core index']
  #allocation1 [shape = 'u32[144,128]{1,0:T(1,128)}', space=vmem, size = 0x12000, scoped, tag = 'internal scratch']
  %s0 = inlined_call_operand.vmem [shape: f32[2,8,2], index: 0, kind: input, shape index: {}]
  %s1 = inlined_call_operand.vmem [shape: f32[2,1,1], index: 1, kind: input, shape index: {}]
  %s2 = inlined_call_operand.vmem [shape: f32[784,128], index: 2, kind: input, shape index: {}]
  %s3 = inlined_call_operand.vmem [shape: f32[2,8,128], index: 3, kind: output, shape index: {}]
  %s4 = sld [smem:[#allocation0]]
  $region45: #{graph_transition_forward.1} parent=0
    _
  %s6 = ssub.s32 1, %s4
  %s7 = scalar_select 0, %s6, %s4
  loop: start=0, step=1, limit=4
  $region2: #{graph_transition_forward.1} parent=0 // loop_pre_header
    _
  $region3: #{graph_transition_forward.1} parent=0 // loop_header
    %s9 = sphi 0, %s13
    %p10 = scmp.ge.s32.totalorder %s9, 4
    %s19 = sphi 0, %s21
    %s22 = sphi 0, %s19
    %s23 = sphi 0, %s22
    %s39 = sphi 0, %s23
    %s45 = sphi 0, %s47
    %s48 = sphi 0, %s45
    %s49 = sphi 0, %s48
    %s65 = sphi 0, %s49
    %s69 = sphi 0, %s69
    %s71 = sphi 0, %s69
    %s72 = sphi 0, %s71
    %s86 = sphi 0, %s72
    %s92 = sphi 0, %s94
    %s95 = sphi 0, %s92
    %s96 = sphi 0, %s95
    %s112 = sphi 0, %s96
  $region4: #{graph_transition_forward.1} parent=0 // loop_header_branch
    %12 = sbr.rel (%p10) target = $region8
  $region5: #{graph_transition_forward.1} parent=0 // loop_body
    %s14 = ssub.s32 %s9, 1
    %s15 = ssub.s32 %s9, 2
    %s16 = sadd.s32 %s9, 1
    %s17 = ssub.s32 %s9, %s16
    %p18 = scmp.eq.s32.totalorder %s17, 0
    %s20 = sadd.s32 %s19, 1
    %s21 = scalar_select %p18, %s19, %s20
    %p24 = pneg %p18
    %p25 = scmp.eq.s32.totalorder %s9, 1
    %p26 = por %p24, %p25
    %p27 = scmp.ne.s32.totalorder %s19, %s22
    %p28 = scmp.eq.s32.totalorder %s9, 0
    %p29 = por %p27, %p28
    %p30 = scmp.ne.s32.totalorder %s19, %s22
    %p31 = scmp.eq.s32.totalorder %s14, 1
    %p32 = por %p30, %p31
    %p33 = scmp.ne.s32.totalorder %s22, %s23
    %p34 = scmp.eq.s32.totalorder %s14, 0
    %p35 = por %p33, %p34
    %p36 = scmp.ne.s32.totalorder %s22, %s23
    %p37 = scmp.eq.s32.totalorder %s15, 1
    %p38 = por %p36, %p37
    %p40 = scmp.ne.s32.totalorder %s23, %s39
    %p41 = scmp.eq.s32.totalorder %s15, 0
    %p42 = por %p40, %p41
    %s43 = ssub.s32 %s9, %s16
    %p44 = scmp.eq.s32.totalorder %s43, 0
    %s46 = sadd.s32 %s45, 1
    %s47 = scalar_select %p44, %s45, %s46
    %p50 = pneg %p44
    %p51 = scmp.eq.s32.totalorder %s9, 1
    %p52 = por %p50, %p51
    %p53 = scmp.ne.s32.totalorder %s45, %s48
    %p54 = scmp.eq.s32.totalorder %s9, 0
    %p55 = por %p53, %p54
    %p56 = scmp.ne.s32.totalorder %s45, %s48
    %p57 = scmp.eq.s32.totalorder %s14, 1
    %p58 = por %p56, %p57
    %p59 = scmp.ne.s32.totalorder %s48, %s49
    %p60 = scmp.eq.s32.totalorder %s14, 0
    %p61 = por %p59, %p60
    %p62 = scmp.ne.s32.totalorder %s48, %s49
    %p63 = scmp.eq.s32.totalorder %s15, 1
    %p64 = por %p62, %p63
    %p66 = scmp.ne.s32.totalorder %s49, %s65
    %p67 = scmp.eq.s32.totalorder %s15, 0
    %p68 = por %p66, %p67
    %s70 = sadd.s32 %s69, 1
    %p73 = scmp.eq.s32.totalorder %s9, 1
    %p74 = scmp.ne.s32.totalorder %s69, %s71
    %p75 = scmp.eq.s32.totalorder %s9, 0
    %p76 = por %p74, %p75
    %p77 = scmp.ne.s32.totalorder %s69, %s71
    %p78 = scmp.eq.s32.totalorder %s14, 1
    %p79 = por %p77, %p78
    %p80 = scmp.ne.s32.totalorder %s71, %s72
    %p81 = scmp.eq.s32.totalorder %s14, 0
    %p82 = por %p80, %p81
    %p83 = scmp.ne.s32.totalorder %s71, %s72
    %p84 = scmp.eq.s32.totalorder %s15, 1
    %p85 = por %p83, %p84
    %p87 = scmp.ne.s32.totalorder %s72, %s86
    %p88 = scmp.eq.s32.totalorder %s15, 0
    %p89 = por %p87, %p88
    %s90 = ssub.s32 %s9, %s16
    %p91 = scmp.eq.s32.totalorder %s90, 0
    %s93 = sadd.s32 %s92, 1
    %s94 = scalar_select %p91, %s92, %s93
    %p97 = pneg %p91
    %p98 = scmp.eq.s32.totalorder %s9, 1
    %p99 = por %p97, %p98
    %p100 = scmp.ne.s32.totalorder %s92, %s95
    %p101 = scmp.eq.s32.totalorder %s9, 0
    %p102 = por %p100, %p101
    %p103 = scmp.ne.s32.totalorder %s92, %s95
    %p104 = scmp.eq.s32.totalorder %s14, 1
    %p105 = por %p103, %p104
    %p106 = scmp.ne.s32.totalorder %s95, %s96
    %p107 = scmp.eq.s32.totalorder %s14, 0
    %p108 = por %p106, %p107
    %p109 = scmp.ne.s32.totalorder %s95, %s96
    %p110 = scmp.eq.s32.totalorder %s15, 1
    %p111 = por %p109, %p110
    %p113 = scmp.ne.s32.totalorder %s96, %s112
    %p114 = scmp.eq.s32.totalorder %s15, 0
    %p115 = por %p113, %p114
    %p116 = scmp.le.s32.totalorder 1, %s9
    %p117 = scmp.lt.s32.totalorder %s9, 3
    %p118 = pnand %p116, %p117
    %p119 = pneg %p118
    // Predicated region
    $region9: #{graph_transition_forward.1} parent=5 // pred_check
      _
    $region10: #{graph_transition_forward.1} parent=5 // pred_check_branch
      %121 = sbr.rel (%p118) target = $region12
    $region11: #{graph_transition_forward.1} parent=5 // pred_region
      %s122 = ssub.s32 %s9, 1
      // Predicated region
      $region13: #{graph_transition_forward.1} parent=11 // pred_check
        %p123 = pneg %p82
      $region14: #{graph_transition_forward.1} parent=11 // pred_check_branch
        %125 = sbr.rel (%p123) target = $region16
      $region15: #{graph_transition_forward.1} parent=11 // pred_region
        _
      $region16: #{graph_transition_forward.1} parent=11 // pred_fallthru
        _
    $region12: #{graph_transition_forward.1} parent=5 // pred_fallthru
      _
    %p126 = scmp.lt.s32.totalorder %s9, 2
    // Predicated region
    $region17: #{graph_transition_forward.1} parent=5 // pred_check
      %p127 = pneg %p126
    $region18: #{graph_transition_forward.1} parent=5 // pred_check_branch
      %129 = sbr.rel (%p127) target = $region20
    $region19: #{graph_transition_forward.1} parent=5 // pred_region
      // Predicated region
      $region21: #{graph_transition_forward.1} parent=19 // pred_check
        %p130 = pneg %p29
      $region22: #{graph_transition_forward.1} parent=19 // pred_check_branch
        %132 = sbr.rel (%p130) target = $region24
      $region23: #{graph_transition_forward.1} parent=19 // pred_region
        %p133 = scmp.lt.s32.totalorder %s9, 1
        %s134 = scalar_select %p133, %s9, 1
        %s135 = smul.addr %s134, 8
        %s136 = scalar_lea.vmem %s0, %s135
      $region24: #{graph_transition_forward.1} parent=19 // pred_fallthru
        _
      // Predicated region
      $region25: #{graph_transition_forward.1} parent=19 // pred_check
        %p137 = pneg %p55
      $region26: #{graph_transition_forward.1} parent=19 // pred_check_branch
        %139 = sbr.rel (%p137) target = $region28
      $region27: #{graph_transition_forward.1} parent=19 // pred_region
        %p140 = scmp.lt.s32.totalorder %s9, 1
        %s141 = scalar_select %p140, %s9, 1
        %s142 = scalar_lea.vmem %s1, %s141
      $region28: #{graph_transition_forward.1} parent=19 // pred_fallthru
        _
    $region20: #{graph_transition_forward.1} parent=5 // pred_fallthru
      _
    %p143 = scmp.le.s32.totalorder 1, %s9
    %p144 = scmp.lt.s32.totalorder %s9, 3
    %p145 = pnand %p143, %p144
    %p146 = pneg %p145
    // Predicated region
    $region29: #{graph_transition_forward.1} parent=5 // pred_check
      _
    $region30: #{graph_transition_forward.1} parent=5 // pred_check_branch
      %148 = sbr.rel (%p145) target = $region32
    $region31: #{graph_transition_forward.1} parent=5 // pred_region
      %s149 = ssub.s32 %s9, 1
      %p150 = scmp.lt.s32.totalorder %s14, 1
      %s151 = scalar_select %p150, %s14, 1
      %s152 = smul.addr %s151, 8
      %s153 = scalar_lea.vmem %s0, %s152
      %p154 = pneg %p35
      %p155 = pneg %p32
      %p156 = scmp.lt.s32.totalorder %s14, 1
      %s157 = scalar_select %p156, %s14, 1
      %s158 = scalar_lea.vmem %s1, %s157
      %p159 = pneg %p61
      %p160 = pneg %p58
      %p161 = pneg %p82
      %p162 = pneg %p79
      %p163 = pneg %p108
      %p164 = pneg %p105
      %p165 = scmp.lt.s32.totalorder %s14, 1
      %s166 = scalar_select %p165, %s14, 1
      %s167 = smul.addr %s166, 8
      %s168 = scalar_lea.vmem %s3, %s167
      %p169 = scmp.lt.s32.totalorder %s14, 1
      %s170 = scalar_select %p169, %s14, 1
      %s171 = smul.addr %s170, 8
      %s172 = scalar_lea.vmem %s0, %s171
      %p173 = scmp.lt.s32.totalorder %s14, 1
      %s174 = scalar_select %p173, %s14, 1
      %s175 = scalar_lea.vmem %s1, %s174
      %p176 = scmp.lt.s32.totalorder %s14, 1
      %s177 = scalar_select %p176, %s14, 1
      %s178 = smul.addr %s177, 8
      %s179 = scalar_lea.vmem %s3, %s178
      %v180 = vld [vmem:[%s172] sm:$0xff]
      %v181 = vld [vmem:[%s175] sm:$0x1]
      %v182 = vld [vmem:[%s2] sm:$0x3]
      %vm183 = vcmask 15360
      %v185 = vsel %vm183, %v180, 0
      %vm187 = vcmask 1041408
      %v189 = vsel %vm187, %v182, 0
      %191 = vmatprep.subr.mxu0 0.0
      %192 = vmatpush1.msra.mxu0 %v189
      %193 = vmatprep.subr.mxu0 0.0
      %194 = vmatpush1.msra.mxu0 0.0
      %195 = vmatprep.subr.mxu0 0.0
      %196 = vmatpush1.msra.mxu0 0.0
      %197 = vmatprep.subr.mxu0 0.0
      %198 = vmatpush1.msra.mxu0 0.0
      %199 = vmatprep.subr.mxu0 0.0
      %200 = vmatpush1.msra.mxu0 0.0
      %201 = vmatprep.subr.mxu0 0.0
      %202 = vmatpush1.msra.mxu0 0.0
      %203 = vmatprep.subr.mxu0 0.0
      %204 = vmatpush1.msra.mxu0 0.0
      %205 = vmatprep.subr.mxu0 0.0
      %206 = vmatpush1.msra.mxu0 0.0
      %207 = vmatprep.subr.mxu0 0.0
      %208 = vmatpush1.msra.mxu0 0.0
      %209 = vmatprep.subr.mxu0 0.0
      %210 = vmatpush1.msra.mxu0 0.0
      %211 = vmatprep.subr.mxu0 0.0
      %212 = vmatpush1.msra.mxu0 0.0
      %213 = vmatprep.subr.mxu0 0.0
      %214 = vmatpush1.msra.mxu0 0.0
      %215 = vmatprep.subr.mxu0 0.0
      %216 = vmatpush1.msra.mxu0 0.0
      %217 = vmatprep.subr.mxu0 0.0
      %218 = vmatpush1.msra.mxu0 0.0
      %219 = vmatprep.subr.mxu0 0.0
      %220 = vmatpush1.msra.mxu0 0.0
      %221 = vmatprep.subr.mxu0 0.0
      %222 = vmatpush1.msra.mxu0 0.0
      %223 = vmatprep.subr.mxu0 0.0
      %224 = vmatpush1.msra.mxu0 0.0
      %225 = vmatprep.subr.mxu0 0.0
      %226 = vmatpush1.msra.mxu0 0.0
      %227 = vmatprep.subr.mxu0 0.0
      %228 = vmatpush1.msra.mxu0 0.0
      %229 = vmatprep.subr.mxu0 0.0
      %230 = vmatpush1.msra.mxu0 0.0
      %231 = vmatprep.subr.mxu0 0.0
      %232 = vmatpush1.msra.mxu0 0.0
      %233 = vmatprep.subr.mxu0 0.0
      %234 = vmatpush1.msra.mxu0 0.0
      %235 = vmatprep.subr.mxu0 0.0
      %236 = vmatpush1.msra.mxu0 0.0
      %237 = vmatprep.subr.mxu0 0.0
      %238 = vmatpush1.msra.mxu0 0.0
      %239 = vmatprep.subr.mxu0 0.0
      %240 = vmatpush1.msra.mxu0 0.0
      %241 = vmatprep.subr.mxu0 0.0
      %242 = vmatpush1.msra.mxu0 0.0
      %243 = vmatprep.subr.mxu0 0.0
      %244 = vmatpush1.msra.mxu0 0.0
      %245 = vmatprep.subr.mxu0 0.0
      %246 = vmatpush1.msra.mxu0 0.0
      %247 = vmatprep.subr.mxu0 0.0
      %248 = vmatpush1.msra.mxu0 0.0
      %249 = vmatprep.subr.mxu0 0.0
      %250 = vmatpush1.msra.mxu0 0.0
      %251 = vmatprep.subr.mxu0 0.0
      %252 = vmatpush1.msra.mxu0 0.0
      %253 = vmatprep.subr.mxu0 0.0
      %254 = vmatpush1.msra.mxu0 0.0
      %255 = vmatprep.mubr.f32.mxu0 0.0
      %256 = vmatmul.mubr.f32.gmra.mrb[0].mxu0 %v185
      %v257 = vpop.f32.mrb[0].mxu0
      %v258 = vadd.f32 0.0, %v257
      %v259 = vpop.f32.mrb[0].mxu0
      %260 = vdwg.mxu0
      %v261 = vld [vmem:[%s2 + $0x2] sm:$0x3]
      %v263 = vsel %vm187, %v261, 0
      %265 = vmatprep.subr.mxu0 0.0
      %266 = vmatpush1.msra.mxu0 %v263
      %267 = vmatprep.subr.mxu0 0.0
      %268 = vmatpush1.msra.mxu0 0.0
      %269 = vmatprep.subr.mxu0 0.0
      %270 = vmatpush1.msra.mxu0 0.0
      %271 = vmatprep.subr.mxu0 0.0
      %272 = vmatpush1.msra.mxu0 0.0
      %273 = vmatprep.subr.mxu0 0.0
      %274 = vmatpush1.msra.mxu0 0.0
      %275 = vmatprep.subr.mxu0 0.0
      %276 = vmatpush1.msra.mxu0 0.0
      %277 = vmatprep.subr.mxu0 0.0
      %278 = vmatpush1.msra.mxu0 0.0
      %279 = vmatprep.subr.mxu0 0.0
      %280 = vmatpush1.msra.mxu0 0.0
      %281 = vmatprep.subr.mxu0 0.0
      %282 = vmatpush1.msra.mxu0 0.0
      %283 = vmatprep.subr.mxu0 0.0
      %284 = vmatpush1.msra.mxu0 0.0
      %285 = vmatprep.subr.mxu0 0.0
      %286 = vmatpush1.msra.mxu0 0.0
      %287 = vmatprep.subr.mxu0 0.0
      %288 = vmatpush1.msra.mxu0 0.0
      %289 = vmatprep.subr.mxu0 0.0
      %290 = vmatpush1.msra.mxu0 0.0
      %291 = vmatprep.subr.mxu0 0.0
      %292 = vmatpush1.msra.mxu0 0.0
      %293 = vmatprep.subr.mxu0 0.0
      %294 = vmatpush1.msra.mxu0 0.0
      %295 = vmatprep.subr.mxu0 0.0
      %296 = vmatpush1.msra.mxu0 0.0
      %297 = vmatprep.subr.mxu0 0.0
      %298 = vmatpush1.msra.mxu0 0.0
      %299 = vmatprep.subr.mxu0 0.0
      %300 = vmatpush1.msra.mxu0 0.0
      %301 = vmatprep.subr.mxu0 0.0
      %302 = vmatpush1.msra.mxu0 0.0
      %303 = vmatprep.subr.mxu0 0.0
      %304 = vmatpush1.msra.mxu0 0.0
      %305 = vmatprep.subr.mxu0 0.0
      %306 = vmatpush1.msra.mxu0 0.0
      %307 = vmatprep.subr.mxu0 0.0
      %308 = vmatpush1.msra.mxu0 0.0
      %309 = vmatprep.subr.mxu0 0.0
      %310 = vmatpush1.msra.mxu0 0.0
      %311 = vmatprep.subr.mxu0 0.0
      %312 = vmatpush1.msra.mxu0 0.0
      %313 = vmatprep.subr.mxu0 0.0
      %314 = vmatpush1.msra.mxu0 0.0
      %315 = vmatprep.subr.mxu0 0.0
      %316 = vmatpush1.msra.mxu0 0.0
      %317 = vmatprep.subr.mxu0 0.0
      %318 = vmatpush1.msra.mxu0 0.0
      %319 = vmatprep.subr.mxu0 0.0
      %320 = vmatpush1.msra.mxu0 0.0
      %321 = vmatprep.subr.mxu0 0.0
      %322 = vmatpush1.msra.mxu0 0.0
      %323 = vmatprep.subr.mxu0 0.0
      %324 = vmatpush1.msra.mxu0 0.0
      %325 = vmatprep.subr.mxu0 0.0
      %326 = vmatpush1.msra.mxu0 0.0
      %327 = vmatprep.subr.mxu0 0.0
      %328 = vmatpush1.msra.mxu0 0.0
      %329 = vmatprep.mubr.f32.mxu0 0.0
      %330 = vmatmul.mubr.f32.gmra.mrb[0].mxu0 %v185
      %v331 = vpop.f32.mrb[0].mxu0
      %v332 = vadd.f32 0.0, %v331
      %v333 = vpop.f32.mrb[0].mxu0
      %334 = vdwg.mxu0
      %v335 = vld [vmem:[%s2 + $0x4] sm:$0x1]
      %337 = vset.pattern.permute.xlu0 0
      %338 = vperm.xlu0 %337, %v181
      %v339 = vpop.permute.xlu0 %338
      %v341 = vlaneseq
      %v342 = vshrl.u32 %v341, 7
      %v343 = vsub.s32 0, %v342
      %v344 = vrot.slane %v339, %v343
      %v345 = vmul.f32 %v344, %v335
      %v346 = vld [vmem:[%s2 + $0x5] sm:$0x1]
      %v347 = vadd.f32 %v345, %v346
      %v349 = vcombine.high %v258, %v258
      %v351 = vunpack.c.l.s4 1966171168
      %v352 = vunpack.c.0.s8 %v351
      %v353 = vlaneseq
      %v354 = vshrl.u32 %v353, 7
      %v355 = vsub.s32 %v352, %v354
      %v356 = vrot.slane %v258, %v355
      %v358 = vunpack.c.l.s4 1966171168
      %v359 = vunpack.c.0.s8 %v358
      %v360 = vlaneseq
      %v361 = vshrl.u32 %v360, 7
      %v362 = vsub.s32 %v359, %v361
      %v363 = vrot.slane %v349, %v362
      %v364 = vcombine.high %v356, %v356
      %v365 = vcombine.high %v363, %v363
      %v367 = vunpack.c.l.s4 1966171168
      %v368 = vunpack.c.0.s8 %v367
      %v369 = vlaneseq
      %v370 = vshrl.u32 %v369, 7
      %v371 = vsub.s32 %v368, %v370
      %v372 = vrot.slane %v356, %v371
      %v374 = vunpack.c.l.s4 1966171168
      %v375 = vunpack.c.0.s8 %v374
      %v376 = vlaneseq
      %v377 = vshrl.u32 %v376, 7
      %v378 = vsub.s32 %v375, %v377
      %v379 = vrot.slane %v363, %v378
      %v381 = vunpack.c.l.s4 1966171168
      %v382 = vunpack.c.0.s8 %v381
      %v383 = vlaneseq
      %v384 = vshrl.u32 %v383, 7
      %v385 = vsub.s32 %v382, %v384
      %v386 = vrot.slane %v364, %v385
      %v388 = vunpack.c.l.s4 1966171168
      %v389 = vunpack.c.0.s8 %v388
      %v390 = vlaneseq
      %v391 = vshrl.u32 %v390, 7
      %v392 = vsub.s32 %v389, %v391
      %v393 = vrot.slane %v365, %v392
      %v394 = vcombine.high %v372, %v372
      %v395 = vcombine.high %v379, %v379
      %v396 = vcombine.high %v386, %v386
      %v397 = vcombine.high %v393, %v393
      %v398 = vlaneseq
      %v399 = vshrl.u32 %v398, 7
      %v400 = vsub.s32 0, %v399
      %v401 = vrot.slane %v372, %v400
      %v402 = vlaneseq
      %v403 = vshrl.u32 %v402, 7
      %v404 = vsub.s32 0, %v403
      %v405 = vrot.slane %v386, %v404
      %v406 = vlaneseq
      %v407 = vshrl.u32 %v406, 7
      %v408 = vsub.s32 0, %v407
      %v409 = vrot.slane %v394, %v408
      %v410 = vlaneseq
      %v411 = vshrl.u32 %v410, 7
      %v412 = vsub.s32 0, %v411
      %v413 = vrot.slane %v396, %v412
      %v414 = vlaneseq
      %v415 = vshrl.u32 %v414, 7
      %v416 = vsub.s32 0, %v415
      %v417 = vrot.slane %v379, %v416
      %v418 = vlaneseq
      %v419 = vshrl.u32 %v418, 7
      %v420 = vsub.s32 0, %v419
      %v421 = vrot.slane %v393, %v420
      %v422 = vlaneseq
      %v423 = vshrl.u32 %v422, 7
      %v424 = vsub.s32 0, %v423
      %v425 = vrot.slane %v395, %v424
      %v426 = vlaneseq
      %v427 = vshrl.u32 %v426, 7
      %v428 = vsub.s32 0, %v427
      %v429 = vrot.slane %v397, %v428
      %v438 = vadd.f32 %v401, %v332
      %v439 = vadd.f32 %v405, %v332
      %v440 = vadd.f32 %v409, %v332
      %v441 = vadd.f32 %v413, %v332
      %v442 = vadd.f32 %v417, %v332
      %v443 = vadd.f32 %v421, %v332
      %v444 = vadd.f32 %v425, %v332
      %v445 = vadd.f32 %v429, %v332
      %v446 = vlaneseq
      %v447 = vshrl.u32 %v446, 7
      %v448 = vsub.s32 0, %v447
      %v449 = vrot.slane %v347, %v448
      %v450 = vadd.f32 %v438, %v449
      %v451 = vadd.f32 %v439, %v449
      %v452 = vadd.f32 %v440, %v449
      %v453 = vadd.f32 %v441, %v449
      %v454 = vadd.f32 %v442, %v449
      %v455 = vadd.f32 %v443, %v449
      %v456 = vadd.f32 %v444, %v449
      %v457 = vadd.f32 %v445, %v449
      %v458 = vmax.f32 %v450, 0.0
      %v459 = vmax.f32 %v451, 0.0
      %v460 = vmax.f32 %v452, 0.0
      %v461 = vmax.f32 %v453, 0.0
      %v462 = vmax.f32 %v454, 0.0
      %v463 = vmax.f32 %v455, 0.0
      %v464 = vmax.f32 %v456, 0.0
      %v465 = vmax.f32 %v457, 0.0
      %v466 = vld [vmem:[%s2 + $0x10] sm:$0xff]
      %v467 = vld [vmem:[%s2 + $0x18] sm:$0xff]
      %v468 = vld [vmem:[%s2 + $0x20] sm:$0xff]
      %v469 = vld [vmem:[%s2 + $0x28] sm:$0xff]
      %v470 = vld [vmem:[%s2 + $0x30] sm:$0xff]
      %v471 = vld [vmem:[%s2 + $0x38] sm:$0xff]
      %v472 = vld [vmem:[%s2 + $0x40] sm:$0xff]
      %v473 = vld [vmem:[%s2 + $0x48] sm:$0xff]
      %v474 = vld [vmem:[%s2 + $0x50] sm:$0xff]
      %v475 = vld [vmem:[%s2 + $0x58] sm:$0xff]
      %v476 = vld [vmem:[%s2 + $0x60] sm:$0xff]
      %v477 = vld [vmem:[%s2 + $0x68] sm:$0xff]
      %v478 = vld [vmem:[%s2 + $0x70] sm:$0xff]
      %v479 = vld [vmem:[%s2 + $0x78] sm:$0xff]
      %v480 = vld [vmem:[%s2 + $0x80] sm:$0xff]
      %v481 = vld [vmem:[%s2 + $0x88] sm:$0xff]
      %v482 = vld [vmem:[%s2 + $0x8] sm:$0x1]
      %v483 = vlaneseq
      %v484 = vshrl.u32 %v483, 7
      %v485 = vsub.s32 0, %v484
      %v486 = vrot.slane %v482, %v485
      %487 = vmatprep.subr.mxu0 0.0
      %488 = vmatpush1.msra.mxu0 %v466
      %489 = vmatprep.subr.mxu0 0.0
      %490 = vmatpush1.msra.mxu0 %v467
      %491 = vmatprep.subr.mxu0 0.0
      %492 = vmatpush1.msra.mxu0 %v468
      %493 = vmatprep.subr.mxu0 0.0
      %494 = vmatpush1.msra.mxu0 %v469
      %495 = vmatprep.subr.mxu0 0.0
      %496 = vmatpush1.msra.mxu0 %v470
      %497 = vmatprep.subr.mxu0 0.0
      %498 = vmatpush1.msra.mxu0 %v471
      %499 = vmatprep.subr.mxu0 0.0
      %500 = vmatpush1.msra.mxu0 %v472
      %501 = vmatprep.subr.mxu0 0.0
      %502 = vmatpush1.msra.mxu0 %v473
      %503 = vmatprep.subr.mxu0 0.0
      %504 = vmatpush1.msra.mxu0 %v474
      %505 = vmatprep.subr.mxu0 0.0
      %506 = vmatpush1.msra.mxu0 %v475
      %507 = vmatprep.subr.mxu0 0.0
      %508 = vmatpush1.msra.mxu0 %v476
      %509 = vmatprep.subr.mxu0 0.0
      %510 = vmatpush1.msra.mxu0 %v477
      %511 = vmatprep.subr.mxu0 0.0
      %512 = vmatpush1.msra.mxu0 %v478
      %513 = vmatprep.subr.mxu0 0.0
      %514 = vmatpush1.msra.mxu0 %v479
      %515 = vmatprep.subr.mxu0 0.0
      %516 = vmatpush1.msra.mxu0 %v480
      %517 = vmatprep.subr.mxu0 0.0
      %518 = vmatpush1.msra.mxu0 %v481
      %519 = vmatprep.subr.mxu0 0.0
      %520 = vmatpush1.msra.mxu0 0.0
      %521 = vmatprep.subr.mxu0 0.0
      %522 = vmatpush1.msra.mxu0 0.0
      %523 = vmatprep.subr.mxu0 0.0
      %524 = vmatpush1.msra.mxu0 0.0
      %525 = vmatprep.subr.mxu0 0.0
      %526 = vmatpush1.msra.mxu0 0.0
      %527 = vmatprep.subr.mxu0 0.0
      %528 = vmatpush1.msra.mxu0 0.0
      %529 = vmatprep.subr.mxu0 0.0
      %530 = vmatpush1.msra.mxu0 0.0
      %531 = vmatprep.subr.mxu0 0.0
      %532 = vmatpush1.msra.mxu0 0.0
      %533 = vmatprep.subr.mxu0 0.0
      %534 = vmatpush1.msra.mxu0 0.0
      %535 = vmatprep.subr.mxu0 0.0
      %536 = vmatpush1.msra.mxu0 0.0
      %537 = vmatprep.subr.mxu0 0.0
      %538 = vmatpush1.msra.mxu0 0.0
      %539 = vmatprep.subr.mxu0 0.0
      %540 = vmatpush1.msra.mxu0 0.0
      %541 = vmatprep.subr.mxu0 0.0
      %542 = vmatpush1.msra.mxu0 0.0
      %543 = vmatprep.subr.mxu0 0.0
      %544 = vmatpush1.msra.mxu0 0.0
      %545 = vmatprep.subr.mxu0 0.0
      %546 = vmatpush1.msra.mxu0 0.0
      %547 = vmatprep.subr.mxu0 0.0
      %548 = vmatpush1.msra.mxu0 0.0
      %549 = vmatprep.subr.mxu0 0.0
      %550 = vmatpush1.msra.mxu0 0.0
      %551 = vmatprep.mubr.f32.mxu0 0.0
      %552 = vmatmul.mubr.f32.gmra.mrb[0].mxu0 %v458
      %v553 = vpop.f32.mrb[0].mxu0
      %v554 = vadd.f32 %v486, %v553
      %v555 = vpop.f32.mrb[0].mxu0
      %556 = vmatprep.mubr.f32.mxu0 0.0
      %557 = vmatmul.mubr.f32.gmra.mrb[0].mxu0 %v459
      %v558 = vpop.f32.mrb[0].mxu0
      %v559 = vadd.f32 %v486, %v558
      %v560 = vpop.f32.mrb[0].mxu0
      %561 = vmatprep.mubr.f32.mxu0 0.0
      %562 = vmatmul.mubr.f32.gmra.mrb[0].mxu0 %v460
      %v563 = vpop.f32.mrb[0].mxu0
      %v564 = vadd.f32 %v486, %v563
      %v565 = vpop.f32.mrb[0].mxu0
      %566 = vmatprep.mubr.f32.mxu0 0.0
      %567 = vmatmul.mubr.f32.gmra.mrb[0].mxu0 %v461
      %v568 = vpop.f32.mrb[0].mxu0
      %v569 = vadd.f32 %v486, %v568
      %v570 = vpop.f32.mrb[0].mxu0
      %571 = vmatprep.mubr.f32.mxu0 0.0
      %572 = vmatmul.mubr.f32.gmra.mrb[0].mxu0 %v462
      %v573 = vpop.f32.mrb[0].mxu0
      %v574 = vadd.f32 %v486, %v573
      %v575 = vpop.f32.mrb[0].mxu0
      %576 = vmatprep.mubr.f32.mxu0 0.0
      %577 = vmatmul.mubr.f32.gmra.mrb[0].mxu0 %v463
      %v578 = vpop.f32.mrb[0].mxu0
      %v579 = vadd.f32 %v486, %v578
      %v580 = vpop.f32.mrb[0].mxu0
      %581 = vmatprep.mubr.f32.mxu0 0.0
      %582 = vmatmul.mubr.f32.gmra.mrb[0].mxu0 %v464
      %v583 = vpop.f32.mrb[0].mxu0
      %v584 = vadd.f32 %v486, %v583
      %v585 = vpop.f32.mrb[0].mxu0
      %586 = vmatprep.mubr.f32.mxu0 0.0
      %587 = vmatmul.mubr.f32.gmra.mrb[0].mxu0 %v465
      %v588 = vpop.f32.mrb[0].mxu0
      %v589 = vadd.f32 %v486, %v588
      %v590 = vpop.f32.mrb[0].mxu0
      %591 = vdwg.mxu0
      %v592 = vmax.f32 %v554, 0.0
      %v593 = vmax.f32 %v559, 0.0
      %v594 = vmax.f32 %v564, 0.0
      %v595 = vmax.f32 %v569, 0.0
      %v596 = vmax.f32 %v574, 0.0
      %v597 = vmax.f32 %v579, 0.0
      %v598 = vmax.f32 %v584, 0.0
      %v599 = vmax.f32 %v589, 0.0
      %v600 = vld [vmem:[%s2 + $0x90] sm:$0xff]
      %v601 = vld [vmem:[%s2 + $0x98] sm:$0xff]
      %v602 = vld [vmem:[%s2 + $0xa0] sm:$0xff]
      %v603 = vld [vmem:[%s2 + $0xa8] sm:$0xff]
      %v604 = vld [vmem:[%s2 + $0xb0] sm:$0xff]
      %v605 = vld [vmem:[%s2 + $0xb8] sm:$0xff]
      %v606 = vld [vmem:[%s2 + $0xc0] sm:$0xff]
      %v607 = vld [vmem:[%s2 + $0xc8] sm:$0xff]
      %v608 = vld [vmem:[%s2 + $0xd0] sm:$0xff]
      %v609 = vld [vmem:[%s2 + $0xd8] sm:$0xff]
      %v610 = vld [vmem:[%s2 + $0xe0] sm:$0xff]
      %v611 = vld [vmem:[%s2 + $0xe8] sm:$0xff]
      %v612 = vld [vmem:[%s2 + $0xf0] sm:$0xff]
      %v613 = vld [vmem:[%s2 + $0xf8] sm:$0xff]
      %v614 = vld [vmem:[%s2 + $0x100] sm:$0xff]
      %v615 = vld [vmem:[%s2 + $0x108] sm:$0xff]
      %v616 = vld [vmem:[%s2 + $0x9] sm:$0x1]
      %v617 = vlaneseq
      %v618 = vshrl.u32 %v617, 7
      %v619 = vsub.s32 0, %v618
      %v620 = vrot.slane %v616, %v619
      %621 = vmatprep.subr.mxu0 0.0
      %622 = vmatpush1.msra.mxu0 %v600
      %623 = vmatprep.subr.mxu0 0.0
      %624 = vmatpush1.msra.mxu0 %v601
      %625 = vmatprep.subr.mxu0 0.0
      %626 = vmatpush1.msra.mxu0 %v602
      %627 = vmatprep.subr.mxu0 0.0
      %628 = vmatpush1.msra.mxu0 %v603
      %629 = vmatprep.subr.mxu0 0.0
      %630 = vmatpush1.msra.mxu0 %v604
      %631 = vmatprep.subr.mxu0 0.0
      %632 = vmatpush1.msra.mxu0 %v605
      %633 = vmatprep.subr.mxu0 0.0
      %634 = vmatpush1.msra.mxu0 %v606
      %635 = vmatprep.subr.mxu0 0.0
      %636 = vmatpush1.msra.mxu0 %v607
      %637 = vmatprep.subr.mxu0 0.0
      %638 = vmatpush1.msra.mxu0 %v608
      %639 = vmatprep.subr.mxu0 0.0
      %640 = vmatpush1.msra.mxu0 %v609
      %641 = vmatprep.subr.mxu0 0.0
      %642 = vmatpush1.msra.mxu0 %v610
      %643 = vmatprep.subr.mxu0 0.0
      %644 = vmatpush1.msra.mxu0 %v611
      %645 = vmatprep.subr.mxu0 0.0
      %646 = vmatpush1.msra.mxu0 %v612
      %647 = vmatprep.subr.mxu0 0.0
      %648 = vmatpush1.msra.mxu0 %v613
      %649 = vmatprep.subr.mxu0 0.0
      %650 = vmatpush1.msra.mxu0 %v614
      %651 = vmatprep.subr.mxu0 0.0
      %652 = vmatpush1.msra.mxu0 %v615
      %653 = vmatprep.subr.mxu0 0.0
      %654 = vmatpush1.msra.mxu0 0.0
      %655 = vmatprep.subr.mxu0 0.0
      %656 = vmatpush1.msra.mxu0 0.0
      %657 = vmatprep.subr.mxu0 0.0
      %658 = vmatpush1.msra.mxu0 0.0
      %659 = vmatprep.subr.mxu0 0.0
      %660 = vmatpush1.msra.mxu0 0.0
      %661 = vmatprep.subr.mxu0 0.0
      %662 = vmatpush1.msra.mxu0 0.0
      %663 = vmatprep.subr.mxu0 0.0
      %664 = vmatpush1.msra.mxu0 0.0
      %665 = vmatprep.subr.mxu0 0.0
      %666 = vmatpush1.msra.mxu0 0.0
      %667 = vmatprep.subr.mxu0 0.0
      %668 = vmatpush1.msra.mxu0 0.0
      %669 = vmatprep.subr.mxu0 0.0
      %670 = vmatpush1.msra.mxu0 0.0
      %671 = vmatprep.subr.mxu0 0.0
      %672 = vmatpush1.msra.mxu0 0.0
      %673 = vmatprep.subr.mxu0 0.0
      %674 = vmatpush1.msra.mxu0 0.0
      %675 = vmatprep.subr.mxu0 0.0
      %676 = vmatpush1.msra.mxu0 0.0
      %677 = vmatprep.subr.mxu0 0.0
      %678 = vmatpush1.msra.mxu0 0.0
      %679 = vmatprep.subr.mxu0 0.0
      %680 = vmatpush1.msra.mxu0 0.0
      %681 = vmatprep.subr.mxu0 0.0
      %682 = vmatpush1.msra.mxu0 0.0
      %683 = vmatprep.subr.mxu0 0.0
      %684 = vmatpush1.msra.mxu0 0.0
      %685 = vmatprep.mubr.f32.mxu0 0.0
      %686 = vmatmul.mubr.f32.gmra.mrb[0].mxu0 %v592
      %v687 = vpop.f32.mrb[0].mxu0
      %v688 = vadd.f32 %v620, %v687
      %v689 = vpop.f32.mrb[0].mxu0
      %690 = vmatprep.mubr.f32.mxu0 0.0
      %691 = vmatmul.mubr.f32.gmra.mrb[0].mxu0 %v593
      %v692 = vpop.f32.mrb[0].mxu0
      %v693 = vadd.f32 %v620, %v692
      %v694 = vpop.f32.mrb[0].mxu0
      %695 = vmatprep.mubr.f32.mxu0 0.0
      %696 = vmatmul.mubr.f32.gmra.mrb[0].mxu0 %v594
      %v697 = vpop.f32.mrb[0].mxu0
      %v698 = vadd.f32 %v620, %v697
      %v699 = vpop.f32.mrb[0].mxu0
      %700 = vmatprep.mubr.f32.mxu0 0.0
      %701 = vmatmul.mubr.f32.gmra.mrb[0].mxu0 %v595
      %v702 = vpop.f32.mrb[0].mxu0
      %v703 = vadd.f32 %v620, %v702
      %v704 = vpop.f32.mrb[0].mxu0
      %705 = vmatprep.mubr.f32.mxu0 0.0
      %706 = vmatmul.mubr.f32.gmra.mrb[0].mxu0 %v596
      %v707 = vpop.f32.mrb[0].mxu0
      %v708 = vadd.f32 %v620, %v707
      %v709 = vpop.f32.mrb[0].mxu0
      %710 = vmatprep.mubr.f32.mxu0 0.0
      %711 = vmatmul.mubr.f32.gmra.mrb[0].mxu0 %v597
      %v712 = vpop.f32.mrb[0].mxu0
      %v713 = vadd.f32 %v620, %v712
      %v714 = vpop.f32.mrb[0].mxu0
      %715 = vmatprep.mubr.f32.mxu0 0.0
      %716 = vmatmul.mubr.f32.gmra.mrb[0].mxu0 %v598
      %v717 = vpop.f32.mrb[0].mxu0
      %v718 = vadd.f32 %v620, %v717
      %v719 = vpop.f32.mrb[0].mxu0
      %720 = vmatprep.mubr.f32.mxu0 0.0
      %721 = vmatmul.mubr.f32.gmra.mrb[0].mxu0 %v599
      %v722 = vpop.f32.mrb[0].mxu0
      %v723 = vadd.f32 %v620, %v722
      %v724 = vpop.f32.mrb[0].mxu0
      %725 = vdwg.mxu0
      %v726 = vmax.f32 %v688, 0.0
      %v727 = vmax.f32 %v693, 0.0
      %v728 = vmax.f32 %v698, 0.0
      %v729 = vmax.f32 %v703, 0.0
      %v730 = vmax.f32 %v708, 0.0
      %v731 = vmax.f32 %v713, 0.0
      %v732 = vmax.f32 %v718, 0.0
      %v733 = vmax.f32 %v723, 0.0
      %v734 = vrot.slane %v726, 4
      %v735 = vadd.f32 %v726, %v734
      %v736 = vrot.slane %v735, 2
      %v737 = vadd.f32 %v735, %v736
      %v738 = vrot.slane %v737, 1
      %v739 = vadd.f32 %v737, %v738
      %v740 = vrot.slane %v727, 4
      %v741 = vadd.f32 %v727, %v740
      %v742 = vrot.slane %v741, 2
      %v743 = vadd.f32 %v741, %v742
      %v744 = vrot.slane %v743, 1
      %v745 = vadd.f32 %v743, %v744
      %v746 = vrot.slane %v728, 4
      %v747 = vadd.f32 %v728, %v746
      %v748 = vrot.slane %v747, 2
      %v749 = vadd.f32 %v747, %v748
      %v750 = vrot.slane %v749, 1
      %v751 = vadd.f32 %v749, %v750
      %v752 = vrot.slane %v729, 4
      %v753 = vadd.f32 %v729, %v752
      %v754 = vrot.slane %v753, 2
      %v755 = vadd.f32 %v753, %v754
      %v756 = vrot.slane %v755, 1
      %v757 = vadd.f32 %v755, %v756
      %v758 = vrot.slane %v730, 4
      %v759 = vadd.f32 %v730, %v758
      %v760 = vrot.slane %v759, 2
      %v761 = vadd.f32 %v759, %v760
      %v762 = vrot.slane %v761, 1
      %v763 = vadd.f32 %v761, %v762
      %v764 = vrot.slane %v731, 4
      %v765 = vadd.f32 %v731, %v764
      %v766 = vrot.slane %v765, 2
      %v767 = vadd.f32 %v765, %v766
      %v768 = vrot.slane %v767, 1
      %v769 = vadd.f32 %v767, %v768
      %v770 = vrot.slane %v732, 4
      %v771 = vadd.f32 %v732, %v770
      %v772 = vrot.slane %v771, 2
      %v773 = vadd.f32 %v771, %v772
      %v774 = vrot.slane %v773, 1
      %v775 = vadd.f32 %v773, %v774
      %v776 = vrot.slane %v733, 4
      %v777 = vadd.f32 %v733, %v776
      %v778 = vrot.slane %v777, 2
      %v779 = vadd.f32 %v777, %v778
      %v780 = vrot.slane %v779, 1
      %v781 = vadd.f32 %v779, %v780
      %v782 = vld [vmem:[%s2 + $0x110] sm:$0xff]
      %v783 = vld [vmem:[%s2 + $0x118] sm:$0xff]
      %v784 = vld [vmem:[%s2 + $0x120] sm:$0xff]
      %v785 = vld [vmem:[%s2 + $0x128] sm:$0xff]
      %v786 = vld [vmem:[%s2 + $0x130] sm:$0xff]
      %v787 = vld [vmem:[%s2 + $0x138] sm:$0xff]
      %v788 = vld [vmem:[%s2 + $0x140] sm:$0xff]
      %v789 = vld [vmem:[%s2 + $0x148] sm:$0xff]
      %v790 = vld [vmem:[%s2 + $0x150] sm:$0xff]
      %v791 = vld [vmem:[%s2 + $0x158] sm:$0xff]
      %v792 = vld [vmem:[%s2 + $0x160] sm:$0xff]
      %v793 = vld [vmem:[%s2 + $0x168] sm:$0xff]
      %v794 = vld [vmem:[%s2 + $0x170] sm:$0xff]
      %v795 = vld [vmem:[%s2 + $0x178] sm:$0xff]
      %v796 = vld [vmem:[%s2 + $0x180] sm:$0xff]
      %v797 = vld [vmem:[%s2 + $0x188] sm:$0xff]
      %v798 = vld [vmem:[%s2 + $0x6] sm:$0x3]
      %vm807 = vcmask 1041409
      %v808 = vsel %vm807, %v745, %v739
      %vm809 = vcmask 1042434
      %v810 = vsel %vm809, %v751, %v808
      %vm811 = vcmask 1043459
      %v812 = vsel %vm811, %v757, %v810
      %vm813 = vcmask 1044484
      %v814 = vsel %vm813, %v763, %v812
      %vm815 = vcmask 1045509
      %v816 = vsel %vm815, %v769, %v814
      %vm817 = vcmask 1046534
      %v818 = vsel %vm817, %v775, %v816
      %vm819 = vcmask 1047559
      %v820 = vsel %vm819, %v781, %v818
      %822 = vmatprep.subr.mxu0 0.0
      %823 = vmatpush1.msra.mxu0 %v782
      %824 = vmatprep.subr.mxu0 0.0
      %825 = vmatpush1.msra.mxu0 %v783
      %826 = vmatprep.subr.mxu0 0.0
      %827 = vmatpush1.msra.mxu0 %v784
      %828 = vmatprep.subr.mxu0 0.0
      %829 = vmatpush1.msra.mxu0 %v785
      %830 = vmatprep.subr.mxu0 0.0
      %831 = vmatpush1.msra.mxu0 %v786
      %832 = vmatprep.subr.mxu0 0.0
      %833 = vmatpush1.msra.mxu0 %v787
      %834 = vmatprep.subr.mxu0 0.0
      %835 = vmatpush1.msra.mxu0 %v788
      %836 = vmatprep.subr.mxu0 0.0
      %837 = vmatpush1.msra.mxu0 %v789
      %838 = vmatprep.subr.mxu0 0.0
      %839 = vmatpush1.msra.mxu0 %v790
      %840 = vmatprep.subr.mxu0 0.0
      %841 = vmatpush1.msra.mxu0 %v791
      %842 = vmatprep.subr.mxu0 0.0
      %843 = vmatpush1.msra.mxu0 %v792
      %844 = vmatprep.subr.mxu0 0.0
      %845 = vmatpush1.msra.mxu0 %v793
      %846 = vmatprep.subr.mxu0 0.0
      %847 = vmatpush1.msra.mxu0 %v794
      %848 = vmatprep.subr.mxu0 0.0
      %849 = vmatpush1.msra.mxu0 %v795
      %850 = vmatprep.subr.mxu0 0.0
      %851 = vmatpush1.msra.mxu0 %v796
      %852 = vmatprep.subr.mxu0 0.0
      %853 = vmatpush1.msra.mxu0 %v797
      %854 = vmatprep.subr.mxu0 0.0
      %855 = vmatpush1.msra.mxu0 0.0
      %856 = vmatprep.subr.mxu0 0.0
      %857 = vmatpush1.msra.mxu0 0.0
      %858 = vmatprep.subr.mxu0 0.0
      %859 = vmatpush1.msra.mxu0 0.0
      %860 = vmatprep.subr.mxu0 0.0
      %861 = vmatpush1.msra.mxu0 0.0
      %862 = vmatprep.subr.mxu0 0.0
      %863 = vmatpush1.msra.mxu0 0.0
      %864 = vmatprep.subr.mxu0 0.0
      %865 = vmatpush1.msra.mxu0 0.0
      %866 = vmatprep.subr.mxu0 0.0
      %867 = vmatpush1.msra.mxu0 0.0
      %868 = vmatprep.subr.mxu0 0.0
      %869 = vmatpush1.msra.mxu0 0.0
      %870 = vmatprep.subr.mxu0 0.0
      %871 = vmatpush1.msra.mxu0 0.0
      %872 = vmatprep.subr.mxu0 0.0
      %873 = vmatpush1.msra.mxu0 0.0
      %874 = vmatprep.subr.mxu0 0.0
      %875 = vmatpush1.msra.mxu0 0.0
      %876 = vmatprep.subr.mxu0 0.0
      %877 = vmatpush1.msra.mxu0 0.0
      %878 = vmatprep.subr.mxu0 0.0
      %879 = vmatpush1.msra.mxu0 0.0
      %880 = vmatprep.subr.mxu0 0.0
      %881 = vmatpush1.msra.mxu0 0.0
      %882 = vmatprep.subr.mxu0 0.0
      %883 = vmatpush1.msra.mxu0 0.0
      %884 = vmatprep.subr.mxu0 0.0
      %885 = vmatpush1.msra.mxu0 0.0
      %886 = vmatprep.mubr.f32.mxu0 0.0
      %887 = vmatmul.mubr.f32.gmra.mrb[0].mxu0 %v820
      %v888 = vpop.f32.mrb[0].mxu0
      %v889 = vadd.f32 0.0, %v888
      %v890 = vpop.f32.mrb[0].mxu0
      %891 = vdwg.mxu0
      %v893 = vsel %vm187, %v798, 0
      %895 = vmatprep.subr.mxu0 0.0
      %896 = vmatpush1.msra.mxu0 %v893
      %897 = vmatprep.subr.mxu0 0.0
      %898 = vmatpush1.msra.mxu0 0.0
      %899 = vmatprep.subr.mxu0 0.0
      %900 = vmatpush1.msra.mxu0 0.0
      %901 = vmatprep.subr.mxu0 0.0
      %902 = vmatpush1.msra.mxu0 0.0
      %903 = vmatprep.subr.mxu0 0.0
      %904 = vmatpush1.msra.mxu0 0.0
      %905 = vmatprep.subr.mxu0 0.0
      %906 = vmatpush1.msra.mxu0 0.0
      %907 = vmatprep.subr.mxu0 0.0
      %908 = vmatpush1.msra.mxu0 0.0
      %909 = vmatprep.subr.mxu0 0.0
      %910 = vmatpush1.msra.mxu0 0.0
      %911 = vmatprep.subr.mxu0 0.0
      %912 = vmatpush1.msra.mxu0 0.0
      %913 = vmatprep.subr.mxu0 0.0
      %914 = vmatpush1.msra.mxu0 0.0
      %915 = vmatprep.subr.mxu0 0.0
      %916 = vmatpush1.msra.mxu0 0.0
      %917 = vmatprep.subr.mxu0 0.0
      %918 = vmatpush1.msra.mxu0 0.0
      %919 = vmatprep.subr.mxu0 0.0
      %920 = vmatpush1.msra.mxu0 0.0
      %921 = vmatprep.subr.mxu0 0.0
      %922 = vmatpush1.msra.mxu0 0.0
      %923 = vmatprep.subr.mxu0 0.0
      %924 = vmatpush1.msra.mxu0 0.0
      %925 = vmatprep.subr.mxu0 0.0
      %926 = vmatpush1.msra.mxu0 0.0
      %927 = vmatprep.subr.mxu0 0.0
      %928 = vmatpush1.msra.mxu0 0.0
      %929 = vmatprep.subr.mxu0 0.0
      %930 = vmatpush1.msra.mxu0 0.0
      %931 = vmatprep.subr.mxu0 0.0
      %932 = vmatpush1.msra.mxu0 0.0
      %933 = vmatprep.subr.mxu0 0.0
      %934 = vmatpush1.msra.mxu0 0.0
      %935 = vmatprep.subr.mxu0 0.0
      %936 = vmatpush1.msra.mxu0 0.0
      %937 = vmatprep.subr.mxu0 0.0
      %938 = vmatpush1.msra.mxu0 0.0
      %939 = vmatprep.subr.mxu0 0.0
      %940 = vmatpush1.msra.mxu0 0.0
      %941 = vmatprep.subr.mxu0 0.0
      %942 = vmatpush1.msra.mxu0 0.0
      %943 = vmatprep.subr.mxu0 0.0
      %944 = vmatpush1.msra.mxu0 0.0
      %945 = vmatprep.subr.mxu0 0.0
      %946 = vmatpush1.msra.mxu0 0.0
      %947 = vmatprep.subr.mxu0 0.0
      %948 = vmatpush1.msra.mxu0 0.0
      %949 = vmatprep.subr.mxu0 0.0
      %950 = vmatpush1.msra.mxu0 0.0
      %951 = vmatprep.subr.mxu0 0.0
      %952 = vmatpush1.msra.mxu0 0.0
      %953 = vmatprep.subr.mxu0 0.0
      %954 = vmatpush1.msra.mxu0 0.0
      %955 = vmatprep.subr.mxu0 0.0
      %956 = vmatpush1.msra.mxu0 0.0
      %957 = vmatprep.subr.mxu0 0.0
      %958 = vmatpush1.msra.mxu0 0.0
      %959 = vmatprep.mubr.f32.mxu0 0.0
      %960 = vmatmul.mubr.f32.gmra.mrb[0].mxu0 %v185
      %v961 = vpop.f32.mrb[0].mxu0
      %v962 = vadd.f32 %v889, %v961
      %v963 = vpop.f32.mrb[0].mxu0
      %964 = vdwg.mxu0
      %v965 = vld [vmem:[%s2 + $0xc] sm:$0x1]
      %v966 = vlaneseq
      %v967 = vshrl.u32 %v966, 7
      %v968 = vsub.s32 0, %v967
      %v969 = vrot.slane %v965, %v968
      %v970 = vadd.f32 %v962, %v969
      %v971 = vmax.f32 %v970, 0.0
      %v972 = vld [vmem:[%s2 + $0x190] sm:$0xff]
      %v973 = vld [vmem:[%s2 + $0x198] sm:$0xff]
      %v974 = vld [vmem:[%s2 + $0x1a0] sm:$0xff]
      %v975 = vld [vmem:[%s2 + $0x1a8] sm:$0xff]
      %v976 = vld [vmem:[%s2 + $0x1b0] sm:$0xff]
      %v977 = vld [vmem:[%s2 + $0x1b8] sm:$0xff]
      %v978 = vld [vmem:[%s2 + $0x1c0] sm:$0xff]
      %v979 = vld [vmem:[%s2 + $0x1c8] sm:$0xff]
      %v980 = vld [vmem:[%s2 + $0x1d0] sm:$0xff]
      %v981 = vld [vmem:[%s2 + $0x1d8] sm:$0xff]
      %v982 = vld [vmem:[%s2 + $0x1e0] sm:$0xff]
      %v983 = vld [vmem:[%s2 + $0x1e8] sm:$0xff]
      %v984 = vld [vmem:[%s2 + $0x1f0] sm:$0xff]
      %v985 = vld [vmem:[%s2 + $0x1f8] sm:$0xff]
      %v986 = vld [vmem:[%s2 + $0x200] sm:$0xff]
      %v987 = vld [vmem:[%s2 + $0x208] sm:$0xff]
      %v988 = vld [vmem:[%s2 + $0xa] sm:$0x1]
      %v989 = vlaneseq
      %v990 = vshrl.u32 %v989, 7
      %v991 = vsub.s32 0, %v990
      %v992 = vrot.slane %v988, %v991
      %993 = vmatprep.subr.mxu0 0.0
      %994 = vmatpush1.msra.mxu0 %v972
      %995 = vmatprep.subr.mxu0 0.0
      %996 = vmatpush1.msra.mxu0 %v973
      %997 = vmatprep.subr.mxu0 0.0
      %998 = vmatpush1.msra.mxu0 %v974
      %999 = vmatprep.subr.mxu0 0.0
      %1000 = vmatpush1.msra.mxu0 %v975
      %1001 = vmatprep.subr.mxu0 0.0
      %1002 = vmatpush1.msra.mxu0 %v976
      %1003 = vmatprep.subr.mxu0 0.0
      %1004 = vmatpush1.msra.mxu0 %v977
      %1005 = vmatprep.subr.mxu0 0.0
      %1006 = vmatpush1.msra.mxu0 %v978
      %1007 = vmatprep.subr.mxu0 0.0
      %1008 = vmatpush1.msra.mxu0 %v979
      %1009 = vmatprep.subr.mxu0 0.0
      %1010 = vmatpush1.msra.mxu0 %v980
      %1011 = vmatprep.subr.mxu0 0.0
      %1012 = vmatpush1.msra.mxu0 %v981
      %1013 = vmatprep.subr.mxu0 0.0
      %1014 = vmatpush1.msra.mxu0 %v982
      %1015 = vmatprep.subr.mxu0 0.0
      %1016 = vmatpush1.msra.mxu0 %v983
      %1017 = vmatprep.subr.mxu0 0.0
      %1018 = vmatpush1.msra.mxu0 %v984
      %1019 = vmatprep.subr.mxu0 0.0
      %1020 = vmatpush1.msra.mxu0 %v985
      %1021 = vmatprep.subr.mxu0 0.0
      %1022 = vmatpush1.msra.mxu0 %v986
      %1023 = vmatprep.subr.mxu0 0.0
      %1024 = vmatpush1.msra.mxu0 %v987
      %1025 = vmatprep.subr.mxu0 0.0
      %1026 = vmatpush1.msra.mxu0 0.0
      %1027 = vmatprep.subr.mxu0 0.0
      %1028 = vmatpush1.msra.mxu0 0.0
      %1029 = vmatprep.subr.mxu0 0.0
      %1030 = vmatpush1.msra.mxu0 0.0
      %1031 = vmatprep.subr.mxu0 0.0
      %1032 = vmatpush1.msra.mxu0 0.0
      %1033 = vmatprep.subr.mxu0 0.0
      %1034 = vmatpush1.msra.mxu0 0.0
      %1035 = vmatprep.subr.mxu0 0.0
      %1036 = vmatpush1.msra.mxu0 0.0
      %1037 = vmatprep.subr.mxu0 0.0
      %1038 = vmatpush1.msra.mxu0 0.0
      %1039 = vmatprep.subr.mxu0 0.0
      %1040 = vmatpush1.msra.mxu0 0.0
      %1041 = vmatprep.subr.mxu0 0.0
      %1042 = vmatpush1.msra.mxu0 0.0
      %1043 = vmatprep.subr.mxu0 0.0
      %1044 = vmatpush1.msra.mxu0 0.0
      %1045 = vmatprep.subr.mxu0 0.0
      %1046 = vmatpush1.msra.mxu0 0.0
      %1047 = vmatprep.subr.mxu0 0.0
      %1048 = vmatpush1.msra.mxu0 0.0
      %1049 = vmatprep.subr.mxu0 0.0
      %1050 = vmatpush1.msra.mxu0 0.0
      %1051 = vmatprep.subr.mxu0 0.0
      %1052 = vmatpush1.msra.mxu0 0.0
      %1053 = vmatprep.subr.mxu0 0.0
      %1054 = vmatpush1.msra.mxu0 0.0
      %1055 = vmatprep.subr.mxu0 0.0
      %1056 = vmatpush1.msra.mxu0 0.0
      %1057 = vmatprep.mubr.f32.mxu0 0.0
      %1058 = vmatmul.mubr.f32.gmra.mrb[0].mxu0 %v971
      %v1059 = vpop.f32.mrb[0].mxu0
      %v1060 = vadd.f32 %v992, %v1059
      %v1061 = vpop.f32.mrb[0].mxu0
      %1062 = vdwg.mxu0
      %v1063 = vmax.f32 %v1060, 0.0
      %v1064 = vld [vmem:[%s2 + $0x210] sm:$0xff]
      %v1065 = vld [vmem:[%s2 + $0x218] sm:$0xff]
      %v1066 = vld [vmem:[%s2 + $0x220] sm:$0xff]
      %v1067 = vld [vmem:[%s2 + $0x228] sm:$0xff]
      %v1068 = vld [vmem:[%s2 + $0x230] sm:$0xff]
      %v1069 = vld [vmem:[%s2 + $0x238] sm:$0xff]
      %v1070 = vld [vmem:[%s2 + $0x240] sm:$0xff]
      %v1071 = vld [vmem:[%s2 + $0x248] sm:$0xff]
      %v1072 = vld [vmem:[%s2 + $0x250] sm:$0xff]
      %v1073 = vld [vmem:[%s2 + $0x258] sm:$0xff]
      %v1074 = vld [vmem:[%s2 + $0x260] sm:$0xff]
      %v1075 = vld [vmem:[%s2 + $0x268] sm:$0xff]
      %v1076 = vld [vmem:[%s2 + $0x270] sm:$0xff]
      %v1077 = vld [vmem:[%s2 + $0x278] sm:$0xff]
      %v1078 = vld [vmem:[%s2 + $0x280] sm:$0xff]
      %v1079 = vld [vmem:[%s2 + $0x288] sm:$0xff]
      %v1080 = vld [vmem:[%s2 + $0xb] sm:$0x1]
      %v1081 = vlaneseq
      %v1082 = vshrl.u32 %v1081, 7
      %v1083 = vsub.s32 0, %v1082
      %v1084 = vrot.slane %v1080, %v1083
      %1085 = vmatprep.subr.mxu0 0.0
      %1086 = vmatpush1.msra.mxu0 %v1064
      %1087 = vmatprep.subr.mxu0 0.0
      %1088 = vmatpush1.msra.mxu0 %v1065
      %1089 = vmatprep.subr.mxu0 0.0
      %1090 = vmatpush1.msra.mxu0 %v1066
      %1091 = vmatprep.subr.mxu0 0.0
      %1092 = vmatpush1.msra.mxu0 %v1067
      %1093 = vmatprep.subr.mxu0 0.0
      %1094 = vmatpush1.msra.mxu0 %v1068
      %1095 = vmatprep.subr.mxu0 0.0
      %1096 = vmatpush1.msra.mxu0 %v1069
      %1097 = vmatprep.subr.mxu0 0.0
      %1098 = vmatpush1.msra.mxu0 %v1070
      %1099 = vmatprep.subr.mxu0 0.0
      %1100 = vmatpush1.msra.mxu0 %v1071
      %1101 = vmatprep.subr.mxu0 0.0
      %1102 = vmatpush1.msra.mxu0 %v1072
      %1103 = vmatprep.subr.mxu0 0.0
      %1104 = vmatpush1.msra.mxu0 %v1073
      %1105 = vmatprep.subr.mxu0 0.0
      %1106 = vmatpush1.msra.mxu0 %v1074
      %1107 = vmatprep.subr.mxu0 0.0
      %1108 = vmatpush1.msra.mxu0 %v1075
      %1109 = vmatprep.subr.mxu0 0.0
      %1110 = vmatpush1.msra.mxu0 %v1076
      %1111 = vmatprep.subr.mxu0 0.0
      %1112 = vmatpush1.msra.mxu0 %v1077
      %1113 = vmatprep.subr.mxu0 0.0
      %1114 = vmatpush1.msra.mxu0 %v1078
      %1115 = vmatprep.subr.mxu0 0.0
      %1116 = vmatpush1.msra.mxu0 %v1079
      %1117 = vmatprep.subr.mxu0 0.0
      %1118 = vmatpush1.msra.mxu0 0.0
      %1119 = vmatprep.subr.mxu0 0.0
      %1120 = vmatpush1.msra.mxu0 0.0
      %1121 = vmatprep.subr.mxu0 0.0
      %1122 = vmatpush1.msra.mxu0 0.0
      %1123 = vmatprep.subr.mxu0 0.0
      %1124 = vmatpush1.msra.mxu0 0.0
      %1125 = vmatprep.subr.mxu0 0.0
      %1126 = vmatpush1.msra.mxu0 0.0
      %1127 = vmatprep.subr.mxu0 0.0
      %1128 = vmatpush1.msra.mxu0 0.0
      %1129 = vmatprep.subr.mxu0 0.0
      %1130 = vmatpush1.msra.mxu0 0.0
      %1131 = vmatprep.subr.mxu0 0.0
      %1132 = vmatpush1.msra.mxu0 0.0
      %1133 = vmatprep.subr.mxu0 0.0
      %1134 = vmatpush1.msra.mxu0 0.0
      %1135 = vmatprep.subr.mxu0 0.0
      %1136 = vmatpush1.msra.mxu0 0.0
      %1137 = vmatprep.subr.mxu0 0.0
      %1138 = vmatpush1.msra.mxu0 0.0
      %1139 = vmatprep.subr.mxu0 0.0
      %1140 = vmatpush1.msra.mxu0 0.0
      %1141 = vmatprep.subr.mxu0 0.0
      %1142 = vmatpush1.msra.mxu0 0.0
      %1143 = vmatprep.subr.mxu0 0.0
      %1144 = vmatpush1.msra.mxu0 0.0
      %1145 = vmatprep.subr.mxu0 0.0
      %1146 = vmatpush1.msra.mxu0 0.0
      %1147 = vmatprep.subr.mxu0 0.0
      %1148 = vmatpush1.msra.mxu0 0.0
      %1149 = vmatprep.mubr.f32.mxu0 0.0
      %1150 = vmatmul.mubr.f32.gmra.mrb[0].mxu0 %v1063
      %v1151 = vpop.f32.mrb[0].mxu0
      %v1152 = vadd.f32 %v1084, %v1151
      %v1153 = vpop.f32.mrb[0].mxu0
      %1154 = vdwg.mxu0
      %v1155 = vmax.f32 %v1152, 0.0
      %v1156 = vld [vmem:[%s2 + $0x290] sm:$0xff]
      %v1157 = vld [vmem:[%s2 + $0x298] sm:$0xff]
      %v1158 = vld [vmem:[%s2 + $0x2a0] sm:$0xff]
      %v1159 = vld [vmem:[%s2 + $0x2a8] sm:$0xff]
      %v1160 = vld [vmem:[%s2 + $0x2b0] sm:$0xff]
      %v1161 = vld [vmem:[%s2 + $0x2b8] sm:$0xff]
      %v1162 = vld [vmem:[%s2 + $0x2c0] sm:$0xff]
      %v1163 = vld [vmem:[%s2 + $0x2c8] sm:$0xff]
      %v1164 = vld [vmem:[%s2 + $0x2d0] sm:$0xff]
      %v1165 = vld [vmem:[%s2 + $0x2d8] sm:$0xff]
      %v1166 = vld [vmem:[%s2 + $0x2e0] sm:$0xff]
      %v1167 = vld [vmem:[%s2 + $0x2e8] sm:$0xff]
      %v1168 = vld [vmem:[%s2 + $0x2f0] sm:$0xff]
      %v1169 = vld [vmem:[%s2 + $0x2f8] sm:$0xff]
      %v1170 = vld [vmem:[%s2 + $0x300] sm:$0xff]
      %v1171 = vld [vmem:[%s2 + $0x308] sm:$0xff]
      %v1172 = vld [vmem:[%s2 + $0xd] sm:$0x1]
      %v1173 = vlaneseq
      %v1174 = vshrl.u32 %v1173, 7
      %v1175 = vsub.s32 0, %v1174
      %v1176 = vrot.slane %v1172, %v1175
      %1177 = vmatprep.subr.mxu0 0.0
      %1178 = vmatpush1.msra.mxu0 %v1156
      %1179 = vmatprep.subr.mxu0 0.0
      %1180 = vmatpush1.msra.mxu0 %v1157
      %1181 = vmatprep.subr.mxu0 0.0
      %1182 = vmatpush1.msra.mxu0 %v1158
      %1183 = vmatprep.subr.mxu0 0.0
      %1184 = vmatpush1.msra.mxu0 %v1159
      %1185 = vmatprep.subr.mxu0 0.0
      %1186 = vmatpush1.msra.mxu0 %v1160
      %1187 = vmatprep.subr.mxu0 0.0
      %1188 = vmatpush1.msra.mxu0 %v1161
      %1189 = vmatprep.subr.mxu0 0.0
      %1190 = vmatpush1.msra.mxu0 %v1162
      %1191 = vmatprep.subr.mxu0 0.0
      %1192 = vmatpush1.msra.mxu0 %v1163
      %1193 = vmatprep.subr.mxu0 0.0
      %1194 = vmatpush1.msra.mxu0 %v1164
      %1195 = vmatprep.subr.mxu0 0.0
      %1196 = vmatpush1.msra.mxu0 %v1165
      %1197 = vmatprep.subr.mxu0 0.0
      %1198 = vmatpush1.msra.mxu0 %v1166
      %1199 = vmatprep.subr.mxu0 0.0
      %1200 = vmatpush1.msra.mxu0 %v1167
      %1201 = vmatprep.subr.mxu0 0.0
      %1202 = vmatpush1.msra.mxu0 %v1168
      %1203 = vmatprep.subr.mxu0 0.0
      %1204 = vmatpush1.msra.mxu0 %v1169
      %1205 = vmatprep.subr.mxu0 0.0
      %1206 = vmatpush1.msra.mxu0 %v1170
      %1207 = vmatprep.subr.mxu0 0.0
      %1208 = vmatpush1.msra.mxu0 %v1171
      %1209 = vmatprep.subr.mxu0 0.0
      %1210 = vmatpush1.msra.mxu0 0.0
      %1211 = vmatprep.subr.mxu0 0.0
      %1212 = vmatpush1.msra.mxu0 0.0
      %1213 = vmatprep.subr.mxu0 0.0
      %1214 = vmatpush1.msra.mxu0 0.0
      %1215 = vmatprep.subr.mxu0 0.0
      %1216 = vmatpush1.msra.mxu0 0.0
      %1217 = vmatprep.subr.mxu0 0.0
      %1218 = vmatpush1.msra.mxu0 0.0
      %1219 = vmatprep.subr.mxu0 0.0
      %1220 = vmatpush1.msra.mxu0 0.0
      %1221 = vmatprep.subr.mxu0 0.0
      %1222 = vmatpush1.msra.mxu0 0.0
      %1223 = vmatprep.subr.mxu0 0.0
      %1224 = vmatpush1.msra.mxu0 0.0
      %1225 = vmatprep.subr.mxu0 0.0
      %1226 = vmatpush1.msra.mxu0 0.0
      %1227 = vmatprep.subr.mxu0 0.0
      %1228 = vmatpush1.msra.mxu0 0.0
      %1229 = vmatprep.subr.mxu0 0.0
      %1230 = vmatpush1.msra.mxu0 0.0
      %1231 = vmatprep.subr.mxu0 0.0
      %1232 = vmatpush1.msra.mxu0 0.0
      %1233 = vmatprep.subr.mxu0 0.0
      %1234 = vmatpush1.msra.mxu0 0.0
      %1235 = vmatprep.subr.mxu0 0.0
      %1236 = vmatpush1.msra.mxu0 0.0
      %1237 = vmatprep.subr.mxu0 0.0
      %1238 = vmatpush1.msra.mxu0 0.0
      %1239 = vmatprep.subr.mxu0 0.0
      %1240 = vmatpush1.msra.mxu0 0.0
      %1241 = vmatprep.mubr.f32.mxu0 0.0
      %1242 = vmatmul.mubr.f32.gmra.mrb[0].mxu0 %v1155
      %v1243 = vpop.f32.mrb[0].mxu0
      %v1244 = vadd.f32 %v1176, %v1243
      %v1245 = vpop.f32.mrb[0].mxu0
      %1246 = vdwg.mxu0
      %1247 = vst [vmem:[%s179] sm:$0xff] %v1244
      %p1248 = scmp.lt.s32.totalorder %s14, 1
      %s1249 = scalar_select %p1248, %s14, 1
      %s1250 = smul.addr %s1249, 8
      %s1251 = scalar_lea.vmem %s3, %s1250
      // Predicated region
      $region33: #{graph_transition_forward.1} parent=31 // pred_check
        %p1252 = pneg %p105
      $region34: #{graph_transition_forward.1} parent=31 // pred_check_branch
        %1254 = sbr.rel (%p1252) target = $region36
      $region35: #{graph_transition_forward.1} parent=31 // pred_region
        _
      $region36: #{graph_transition_forward.1} parent=31 // pred_fallthru
        _
    $region32: #{graph_transition_forward.1} parent=5 // pred_fallthru
      _
    %p1255 = scmp.le.s32.totalorder 2, %s9
    // Predicated region
    $region37: #{graph_transition_forward.1} parent=5 // pred_check
      %p1256 = pneg %p1255
    $region38: #{graph_transition_forward.1} parent=5 // pred_check_branch
      %1258 = sbr.rel (%p1256) target = $region40
    $region39: #{graph_transition_forward.1} parent=5 // pred_region
      %s1259 = ssub.s32 %s9, 2
      // Predicated region
      $region41: #{graph_transition_forward.1} parent=39 // pred_check
        %p1260 = pneg %p111
      $region42: #{graph_transition_forward.1} parent=39 // pred_check_branch
        %1262 = sbr.rel (%p1260) target = $region44
      $region43: #{graph_transition_forward.1} parent=39 // pred_region
        %p1263 = scmp.lt.s32.totalorder %s15, 1
        %s1264 = scalar_select %p1263, %s15, 1
        %s1265 = smul.addr %s1264, 8
        %s1266 = scalar_lea.vmem %s3, %s1265
      $region44: #{graph_transition_forward.1} parent=39 // pred_fallthru
        _
    $region40: #{graph_transition_forward.1} parent=5 // pred_fallthru
      _
  $region6: #{graph_transition_forward.1} parent=0 // loop_footer
    %s13 = sadd.s32 1, %s9
  $region7: #{graph_transition_forward.1} parent=0 // loop_footer_branch
    %8 = sbr.rel target = $region3
  $region8: #{graph_transition_forward.1} parent=0 // loop_exit
    _

</llo_original>
